<compile_context>
chip_gen: v7x
topology: tpu7x:2x2x1
jax: 0.10.0
libtpu: 0.0.40
codegen_flags: <defaults>
</compile_context>

<pallas_src>
import functools

import jax
import jax.numpy as jnp
from jax import lax
from jax.experimental import pallas as pl
from jax.experimental.pallas import tpu as pltpu

LANES = 128
TILE_ROWS = 1024  # 1024 x 128 f32 block = 512 KiB; ~2 MiB with in+out double-buffered

_SQRT2 = 1.4142135623730951
_WA = 0.147                          # Winitzki erfinv approximation constant
_WB = 2.0 / (3.141592653589793 * _WA)


def _i32(v):
    """Python int -> int32 constant with two's-complement wrap."""
    v &= 0xFFFFFFFF
    if v >= 1 << 31:
        v -= 1 << 32
    return jnp.int32(v)


def _srl(x, n):
    """Logical right shift for int32 values (mask off propagated sign bits)."""
    return (x >> n) & ((1 << (32 - n)) - 1)


def _lowbias32(x):
    """Fast 32-bit integer hash with good avalanche (lowbias32)."""
    x = x ^ _srl(x, 16)
    x = x * _i32(0x7FEB352D)
    x = x ^ _srl(x, 15)
    x = x * _i32(0x846CA68B)
    x = x ^ _srl(x, 16)
    return x


def _gaussian_noise_kernel(seed_ref, x_ref, o_ref, *, sigma, tile_rows):
    # seed_ref: SMEM scalar-prefetch ref, shape (1,), int32
    i = pl.program_id(0)
    x = x_ref[...]
    shape = x.shape  # (tile_rows, LANES)

    # --- counter-based PRNG: unique global element index, grid-invariant ---
    row = lax.broadcasted_iota(jnp.int32, shape, 0)
    lane = lax.broadcasted_iota(jnp.int32, shape, 1)
    base = (i * tile_rows) * LANES
    ctr = base + row * LANES + lane
    h = ctr ^ (seed_ref[0] * _i32(0x9E3779B9))
    h = _lowbias32(h)

    # --- bits -> uniform strictly inside (0, 1) (keeps log finite) ---
    u = (_srl(h, 8).astype(jnp.float32) + 0.5) * (1.0 / (1 << 24))
    t = 2.0 * u - 1.0  # in (-1, 1)

    # --- standard normal via z = sqrt(2) * erfinv(t) (Winitzki approx) ---
    # log/sqrt go to the EUP slot; the rest is a handful of VPU ops.
    l = jnp.log(1.0 - t * t)
    w = _WB + 0.5 * l
    r = jnp.sqrt(jnp.sqrt(w * w - l * (1.0 / _WA)) - w)   # |erfinv(t)|
    s = jnp.where(t < 0.0, -r, r)                         # signed erfinv(t)

    # out = x * (1 + sigma * N(0,1)); fold sigma * sqrt(2) into one constant.
    xf = x.astype(jnp.float32)
    out = xf * (1.0 + (sigma * _SQRT2) * s)
    o_ref[...] = out.astype(o_ref.dtype)


def gaussian_noise(x, seed, *, sigma=0.1, is_relative_detach=True, training=True):
    """Apply relative Gaussian noise: out = x + N(0,1) * sigma * x.

    `is_relative_detach` only changes gradient flow in PyTorch; forward values
    are identical, so it does not affect this forward-pass kernel.
    """
    del is_relative_detach  # TODO(synk): grad-only semantics (detach) not modeled here
    if not training or sigma == 0.0:
        return x

    orig_shape = x.shape
    n = x.size

    # Lane-dense (rows, 128) view in the ORIGINAL dtype; pad only if needed.
    rem = (-n) % LANES
    flat = jnp.ravel(x)
    if rem:
        flat = jnp.pad(flat, (0, rem))
    x2d = flat.reshape(-1, LANES)
    rows = x2d.shape[0]

    tile_rows = min(TILE_ROWS, rows)  # full-array block if small, else 8-aligned tile
    grid = (pl.cdiv(rows, tile_rows),)

    seed_arr = jnp.asarray([seed], dtype=jnp.int32)
    kernel = functools.partial(
        _gaussian_noise_kernel, sigma=float(sigma), tile_rows=tile_rows
    )

    out2d = pl.pallas_call(
        kernel,
        out_shape=jax.ShapeDtypeStruct((rows, LANES), x.dtype),
        grid_spec=pltpu.PrefetchScalarGridSpec(
            num_scalar_prefetch=1,
            grid=grid,
            in_specs=[pl.BlockSpec((tile_rows, LANES), lambda i, seed: (i, 0))],
            out_specs=pl.BlockSpec((tile_rows, LANES), lambda i, seed: (i, 0)),
        ),
        compiler_params=pltpu.CompilerParams(
            dimension_semantics=("parallel",),   # independent tiles; megacore on v7x
            vmem_limit_bytes=32 * 1024 * 1024,   # small blocks -> plenty of headroom
        ),
    )(seed_arr, x2d)

    out = out2d.reshape(-1)
    if rem:
        out = out[:n]
    return out.reshape(orig_shape)


if __name__ == "__main__":
    key = jax.random.PRNGKey(0)
    # NCHW, small shapes: batch=2, channels=4, spatial=16x16
    x = jax.random.normal(key, (2, 4, 16, 16), dtype=jnp.float32)

    y = gaussian_noise(x, seed=1234, sigma=0.1, training=True)
    y = jax.block_until_ready(y)

    # Shapes / dtype preserved.
    assert y.shape == x.shape and y.dtype == x.dtype

    # Recover implied standard-normal draws: y = x * (1 + 0.1 * n)  =>  n = (y/x - 1)/0.1
    n_hat = (y / x - 1.0) / 0.1
    assert float(jnp.abs(jnp.mean(n_hat))) < 0.25
    assert 0.6 < float(jnp.std(n_hat)) < 1.4

    # Deterministic for a fixed seed.
    y2 = jax.block_until_ready(gaussian_noise(x, seed=1234, sigma=0.1, training=True))
    assert bool(jnp.all(y2 == y))

    # Original dtype is kept end-to-end (no f32 round trip in the wrapper).
    y_bf16 = jax.block_until_ready(
        gaussian_noise(x.astype(jnp.bfloat16), seed=7, sigma=0.1, training=True)
    )
    assert y_bf16.dtype == jnp.bfloat16 and y_bf16.shape == x.shape

    # Eval mode / sigma == 0 are identity.
    y_eval = jax.block_until_ready(gaussian_noise(x, seed=1234, sigma=0.1, training=False))
    assert bool(jnp.all(y_eval == x))
    y_zero = jax.block_until_ready(gaussian_noise(x, seed=1234, sigma=0.0, training=True))
    assert bool(jnp.all(y_zero == x))

    print("KERNEL_OK")
</pallas_src>

<mosaic_0001>
module attributes {stable_mosaic.version = 11 : i64} {
  func.func @_gaussian_noise_kernel(%arg0: i32, %arg1: memref<1xi32, #tpu.memory_space<smem>>, %arg2: memref<16x128xf32, #tpu.memory_space<vmem>>, %arg3: memref<16x128xf32, #tpu.memory_space<vmem>>) attributes {dimension_semantics = [#tpu.dimension_semantics<parallel>], iteration_bounds = array<i64: 1>, scalar_prefetch = 1 : i64, scratch_operands = 0 : i64, tpu.core_type = #tpu.core_type<tc>, window_params = [{transform_indices = @transform_0, window_bounds = array<i64: 16, 128>}, {transform_indices = @transform_1, window_bounds = array<i64: 16, 128>}]} {
    %c0 = arith.constant 0 : index
    %c0_0 = arith.constant 0 : index
    %0 = vector.load %arg2[%c0, %c0_0] : memref<16x128xf32, #tpu.memory_space<vmem>>, vector<16x128xf32>
    %1 = tpu.iota {dimensions = array<i32: 0>} : vector<16x128xi32>
    %2 = tpu.iota {dimensions = array<i32: 1>} : vector<16x128xi32>
    %c16_i32 = arith.constant 16 : i32
    %3 = arith.muli %arg0, %c16_i32 : i32
    %c128_i32 = arith.constant 128 : i32
    %4 = arith.muli %3, %c128_i32 : i32
    %c128_i32_1 = arith.constant 128 : i32
    %5 = vector.broadcast %c128_i32_1 : i32 to vector<16x128xi32>
    %6 = arith.muli %1, %5 : vector<16x128xi32>
    %7 = vector.broadcast %4 : i32 to vector<16x128xi32>
    %8 = arith.addi %7, %6 : vector<16x128xi32>
    %9 = arith.addi %8, %2 : vector<16x128xi32>
    %c0_2 = arith.constant 0 : index
    %10 = memref.load %arg1[%c0_2] : memref<1xi32, #tpu.memory_space<smem>>
    %c-1640531527_i32 = arith.constant -1640531527 : i32
    %11 = arith.muli %10, %c-1640531527_i32 : i32
    %12 = vector.broadcast %11 : i32 to vector<16x128xi32>
    %13 = arith.xori %9, %12 : vector<16x128xi32>
    %c16_i32_3 = arith.constant 16 : i32
    %14 = vector.broadcast %c16_i32_3 : i32 to vector<16x128xi32>
    %15 = arith.shrsi %13, %14 : vector<16x128xi32>
    %c65535_i32 = arith.constant 65535 : i32
    %16 = vector.broadcast %c65535_i32 : i32 to vector<16x128xi32>
    %17 = arith.andi %15, %16 : vector<16x128xi32>
    %18 = arith.xori %13, %17 : vector<16x128xi32>
    %c2146121005_i32 = arith.constant 2146121005 : i32
    %19 = vector.broadcast %c2146121005_i32 : i32 to vector<16x128xi32>
    %20 = arith.muli %18, %19 : vector<16x128xi32>
    %c15_i32 = arith.constant 15 : i32
    %21 = vector.broadcast %c15_i32 : i32 to vector<16x128xi32>
    %22 = arith.shrsi %20, %21 : vector<16x128xi32>
    %c131071_i32 = arith.constant 131071 : i32
    %23 = vector.broadcast %c131071_i32 : i32 to vector<16x128xi32>
    %24 = arith.andi %22, %23 : vector<16x128xi32>
    %25 = arith.xori %20, %24 : vector<16x128xi32>
    %c-2073254261_i32 = arith.constant -2073254261 : i32
    %26 = vector.broadcast %c-2073254261_i32 : i32 to vector<16x128xi32>
    %27 = arith.muli %25, %26 : vector<16x128xi32>
    %c16_i32_4 = arith.constant 16 : i32
    %28 = vector.broadcast %c16_i32_4 : i32 to vector<16x128xi32>
    %29 = arith.shrsi %27, %28 : vector<16x128xi32>
    %c65535_i32_5 = arith.constant 65535 : i32
    %30 = vector.broadcast %c65535_i32_5 : i32 to vector<16x128xi32>
    %31 = arith.andi %29, %30 : vector<16x128xi32>
    %32 = arith.xori %27, %31 : vector<16x128xi32>
    %c8_i32 = arith.constant 8 : i32
    %33 = vector.broadcast %c8_i32 : i32 to vector<16x128xi32>
    %34 = arith.shrsi %32, %33 : vector<16x128xi32>
    %c16777215_i32 = arith.constant 16777215 : i32
    %35 = vector.broadcast %c16777215_i32 : i32 to vector<16x128xi32>
    %36 = arith.andi %34, %35 : vector<16x128xi32>
    %37 = arith.sitofp %36 : vector<16x128xi32> to vector<16x128xf32>
    %cst = arith.constant 5.000000e-01 : f32
    %38 = vector.broadcast %cst : f32 to vector<16x128xf32>
    %39 = arith.addf %37, %38 : vector<16x128xf32>
    %cst_6 = arith.constant 5.96046448E-8 : f32
    %40 = vector.broadcast %cst_6 : f32 to vector<16x128xf32>
    %41 = arith.mulf %39, %40 : vector<16x128xf32>
    %cst_7 = arith.constant 2.000000e+00 : f32
    %42 = vector.broadcast %cst_7 : f32 to vector<16x128xf32>
    %43 = arith.mulf %42, %41 : vector<16x128xf32>
    %cst_8 = arith.constant 1.000000e+00 : f32
    %44 = vector.broadcast %cst_8 : f32 to vector<16x128xf32>
    %45 = arith.subf %43, %44 : vector<16x128xf32>
    %46 = arith.mulf %45, %45 : vector<16x128xf32>
    %cst_9 = arith.constant 1.000000e+00 : f32
    %47 = vector.broadcast %cst_9 : f32 to vector<16x128xf32>
    %48 = arith.subf %47, %46 : vector<16x128xf32>
    %49 = math.log %48 : vector<16x128xf32>
    %cst_10 = arith.constant 5.000000e-01 : f32
    %50 = vector.broadcast %cst_10 : f32 to vector<16x128xf32>
    %51 = arith.mulf %50, %49 : vector<16x128xf32>
    %cst_11 = arith.constant 4.33074665 : f32
    %52 = vector.broadcast %cst_11 : f32 to vector<16x128xf32>
    %53 = arith.addf %52, %51 : vector<16x128xf32>
    %54 = arith.mulf %53, %53 : vector<16x128xf32>
    %cst_12 = arith.constant 6.80272102 : f32
    %55 = vector.broadcast %cst_12 : f32 to vector<16x128xf32>
    %56 = arith.mulf %49, %55 : vector<16x128xf32>
    %57 = arith.subf %54, %56 : vector<16x128xf32>
    %58 = math.sqrt %57 : vector<16x128xf32>
    %59 = arith.subf %58, %53 : vector<16x128xf32>
    %60 = math.sqrt %59 : vector<16x128xf32>
    %cst_13 = arith.constant 0.000000e+00 : f32
    %61 = vector.broadcast %cst_13 : f32 to vector<16x128xf32>
    %62 = arith.cmpf olt, %45, %61 : vector<16x128xf32>
    %cst_14 = arith.constant 0.000000e+00 : f32
    %63 = vector.broadcast %cst_14 : f32 to vector<16x128xf32>
    %64 = arith.subf %63, %60 : vector<16x128xf32>
    %65 = arith.select %62, %64, %60 : vector<16x128xi1>, vector<16x128xf32>
    %cst_15 = arith.constant 0.141421363 : f32
    %66 = vector.broadcast %cst_15 : f32 to vector<16x128xf32>
    %67 = arith.mulf %66, %65 : vector<16x128xf32>
    %cst_16 = arith.constant 1.000000e+00 : f32
    %68 = vector.broadcast %cst_16 : f32 to vector<16x128xf32>
    %69 = arith.addf %68, %67 : vector<16x128xf32>
    %70 = arith.mulf %0, %69 : vector<16x128xf32>
    %c0_17 = arith.constant 0 : index
    %c0_18 = arith.constant 0 : index
    %71 = vector.load %arg3[%c0_17, %c0_18] : memref<16x128xf32, #tpu.memory_space<vmem>>, vector<16x128xf32>
    tpu.vector_store %arg3[%c0_17, %c0_18], %70 {strides = array<i32>} : memref<16x128xf32, #tpu.memory_space<vmem>>, vector<16x128xf32>,
    return
  }
  func.func @transform_0(%arg0: i32, %arg1: memref<1xi32, #tpu.memory_space<smem>>) -> (i32, i32) {
    %c0_i32 = arith.constant 0 : i32
    %c0_i32_0 = arith.constant 0 : i32
    return %arg0, %c0_i32 : i32, i32
  }
  func.func @transform_1(%arg0: i32, %arg1: memref<1xi32, #tpu.memory_space<smem>>) -> (i32, i32) {
    %c0_i32 = arith.constant 0 : i32
    %c0_i32_0 = arith.constant 0 : i32
    return %arg0, %c0_i32 : i32, i32
  }
}

</mosaic_0001>

<llo_original>
// kernel: tpu_custom_call.1
$region0: #{tpu_custom_call.1}
  #allocation0 [shape = 'u32[]', space=smem, size = 0x4, offset = 0x4, fixed_abs, tag = 'smem constant byte address 0x4 - core index']
  #allocation1 [shape = 'u32[144,128]{1,0:T(1,128)}', space=vmem, size = 0x12000, scoped, tag = 'internal scratch']
  #allocation2 [shape = 's32[1]{0}', space=sflag, size = 0x4, scoped, tag = 'scoped memory for tpu_custom_call.1']
  #allocation3 [shape = 's32[1]{0:T(128)S(6)}', space=smem, size = 0x200, scoped, tag = 'prefetched SMEM operand 0']
  %s0 = inlined_call_operand.<no memory space> [shape: s32[1], index: 0, kind: input, shape index: {}]
  %s1 = inlined_call_operand.hbm [shape: f32[16,128], index: 1, kind: input, shape index: {}]
  %s2 = inlined_call_operand.hbm [shape: f32[16,128], index: 2, kind: output, shape index: {}]
  %s3 = sld [smem:[#allocation0]]
  $region18: #{tpu_custom_call.1} parent=0
    _
  %s5 = ssub.s32 1, %s3
  %s6 = scalar_select 0, %s5, %s3
  %7 = sst [smem:[#allocation3]] %s0
  $region1: #{tpu_custom_call.1} parent=0
    #allocation4 [shape = 'u8[8192]{0}', space=vmem, size = 0x2000, scoped, tag = 'input window, operand 1, single buffered']
    #allocation5 [shape = 's32[1]{0}', space=sflag, size = 0x4, scoped, tag = 'scoped memory for tpu_custom_call.1']
    #allocation6 [shape = 's32[1]{0}', space=sflag, size = 0x4, scoped, tag = 'scoped memory for tpu_custom_call.1']
    #allocation7 [shape = 'u8[8192]{0}', space=vmem, size = 0x2000, scoped, tag = 'output window, operand 0, single buffered']
    %8 = vsyncpa [#allocation5], 0
    %9 = vsyncpa [#allocation6], 0
    // Predicated region
    $region2: #{tpu_custom_call.1} parent=1 // pred_check
      _
    $region3: #{tpu_custom_call.1} parent=1 // pred_check_branch
      %11 = sbr.rel (0) target = $region5
    $region4: #{tpu_custom_call.1} parent=1 // pred_region
      %s13 = ssub.s32 256, 256
      %14 = vsyncadd [#allocation5], %s13
      %s15 = sshll.u32 [#allocation4], 4
      %s16 = int_to_ptr.vmem [resolvable:$true] %s15
      %21 = dma.hbm_to_vmem [thread:$0]  %s1, 256, %s16, [#allocation5], 128, 128, 8
    $region5: #{tpu_custom_call.1} parent=1 // pred_fallthru
      _
    // Predicated region
    $region6: #{tpu_custom_call.1} parent=1 // pred_check
      _
    $region7: #{tpu_custom_call.1} parent=1 // pred_check_branch
      %23 = sbr.rel (0) target = $region9
    $region8: #{tpu_custom_call.1} parent=1 // pred_region
      %24 = dma.done [#allocation5], 256
    $region9: #{tpu_custom_call.1} parent=1 // pred_fallthru
      _
    %v25 = vld [vmem:[#allocation4] sm:$0xff]
    %v26 = vld [vmem:[#allocation4 + $0x8] sm:$0xff]
    %v27 = vlaneseq
    %v28 = vshrl.u32 %v27, 7
    %v29 = vadd.s32 %v28, 8
    %v30 = vlaneseq
    %v31 = vand.u32 %v30, 127
    %s32 = smul.u32 0, 2048
    %v33 = vmul.u32 %v28, 128
    %v34 = vmul.u32 %v29, 128
    %v35 = vstv %s32
    %v36 = vadd.s32 %v35, %v33
    %v37 = vadd.s32 %v35, %v34
    %v38 = vadd.s32 %v36, %v31
    %v39 = vadd.s32 %v37, %v31
    %s40 = sld [smem:[#allocation3]]
    %s41 = smul.u32 %s40, 2654435769
    %v42 = vstv %s41
    %v43 = vxor.u32 %v38, %v42
    %v44 = vxor.u32 %v39, %v42
    %v45 = vshra.s32 %v43, 16
    %v46 = vshra.s32 %v44, 16
    %v47 = vand.u32 %v45, 65535
    %v48 = vand.u32 %v46, 65535
    %v49 = vxor.u32 %v43, %v47
    %v50 = vxor.u32 %v44, %v48
    %v51 = vmul.u32 %v49, 2146121005
    %v52 = vmul.u32 %v50, 2146121005
    %v53 = vshra.s32 %v51, 15
    %v54 = vshra.s32 %v52, 15
    %v55 = vand.u32 %v53, 131071
    %v56 = vand.u32 %v54, 131071
    %v57 = vxor.u32 %v51, %v55
    %v58 = vxor.u32 %v52, %v56
    %v59 = vmul.u32 %v57, 2221713035
    %v60 = vmul.u32 %v58, 2221713035
    %v61 = vshra.s32 %v59, 16
    %v62 = vshra.s32 %v60, 16
    %v63 = vand.u32 %v61, 65535
    %v64 = vand.u32 %v62, 65535
    %v65 = vxor.u32 %v59, %v63
    %v66 = vxor.u32 %v60, %v64
    %v67 = vshra.s32 %v65, 8
    %v68 = vshra.s32 %v66, 8
    %v69 = vand.u32 %v67, 16777215
    %v70 = vand.u32 %v68, 16777215
    %v71 = vcvt.s32.f32 %v69
    %v72 = vcvt.s32.f32 %v70
    %v73 = vadd.f32 %v71, 0.5
    %v74 = vadd.f32 %v72, 0.5
    %v75 = vmul.f32 %v73, 5.9604645e-08
    %v76 = vmul.f32 %v74, 5.9604645e-08
    %v77 = vmul.f32 %v75, 2.0
    %v78 = vmul.f32 %v76, 2.0
    %v79 = vsub.f32 %v77, 1.0
    %v80 = vsub.f32 %v78, 1.0
    %v81 = vmul.f32 %v79, %v79
    %v82 = vmul.f32 %v80, %v80
    %v83 = vsub.f32 1.0, %v81
    %v84 = vsub.f32 1.0, %v82
    %v85 = vlog2.pop %v83
    %v86 = vmul.f32 %v85, 0.6931472
    %v87 = vlog2.pop %v84
    %v88 = vmul.f32 %v87, 0.6931472
    %v89 = vmul.f32 %v86, 0.5
    %v90 = vmul.f32 %v88, 0.5
    %v91 = vadd.f32 %v89, 4.3307467
    %v92 = vadd.f32 %v90, 4.3307467
    %v93 = vmul.f32 %v91, %v91
    %v94 = vmul.f32 %v92, %v92
    %v95 = vmul.f32 %v86, 6.802721
    %v96 = vmul.f32 %v88, 6.802721
    %v97 = vsub.f32 %v93, %v95
    %v98 = vsub.f32 %v94, %v96
    %v99 = vrsqrt.pop %v97
    %v100 = vmul.f32 %v97, %v99
    %vm101 = vcmp.eq.f32.partialorder %v97, inf
    %v102 = vsel %vm101, %v97, %v100
    %vm103 = vcmp.eq.f32.partialorder %v97, 0.0
    %v104 = vand.u32 %v97, 2147483648
    %v105 = vsel %vm103, %v104, %v102
    %v106 = vrsqrt.pop %v98
    %v107 = vmul.f32 %v98, %v106
    %vm108 = vcmp.eq.f32.partialorder %v98, inf
    %v109 = vsel %vm108, %v98, %v107
    %vm110 = vcmp.eq.f32.partialorder %v98, 0.0
    %v111 = vand.u32 %v98, 2147483648
    %v112 = vsel %vm110, %v111, %v109
    %v113 = vsub.f32 %v105, %v91
    %v114 = vsub.f32 %v112, %v92
    %v115 = vrsqrt.pop %v113
    %v116 = vmul.f32 %v113, %v115
    %vm117 = vcmp.eq.f32.partialorder %v113, inf
    %v118 = vsel %vm117, %v113, %v116
    %vm119 = vcmp.eq.f32.partialorder %v113, 0.0
    %v120 = vand.u32 %v113, 2147483648
    %v121 = vsel %vm119, %v120, %v118
    %v122 = vrsqrt.pop %v114
    %v123 = vmul.f32 %v114, %v122
    %vm124 = vcmp.eq.f32.partialorder %v114, inf
    %v125 = vsel %vm124, %v114, %v123
    %vm126 = vcmp.eq.f32.partialorder %v114, 0.0
    %v127 = vand.u32 %v114, 2147483648
    %v128 = vsel %vm126, %v127, %v125
    %vm129 = vcmp.lt.f32.partialorder %v79, 0.0
    %vm130 = vcmp.lt.f32.partialorder %v80, 0.0
    %v131 = vsub.f32 0.0, %v121
    %v132 = vsub.f32 0.0, %v128
    %v133 = vsel %vm129, %v131, %v121
    %v134 = vsel %vm130, %v132, %v128
    %v135 = vmul.f32 %v133, 0.14142136
    %v136 = vmul.f32 %v134, 0.14142136
    %v137 = vadd.f32 %v135, 1.0
    %v138 = vadd.f32 %v136, 1.0
    %v139 = vmul.f32 %v25, %v137
    %v140 = vmul.f32 %v26, %v138
    %141 = vst [vmem:[#allocation7] sm:$0xff] %v139
    %142 = vst [vmem:[#allocation7 + $0x8] sm:$0xff] %v140
    // Predicated region
    $region10: #{tpu_custom_call.1} parent=1 // pred_check
      _
    $region11: #{tpu_custom_call.1} parent=1 // pred_check_branch
      %144 = sbr.rel (0) target = $region13
    $region12: #{tpu_custom_call.1} parent=1 // pred_region
      %s146 = ssub.s32 256, 256
      %147 = vsyncadd [#allocation6], %s146
      %s148 = sshll.u32 [#allocation7], 4
      %s149 = int_to_ptr.vmem [resolvable:$true] %s148
      %154 = dma.vmem_to_hbm [thread:$0]  %s149, 256, %s2, [#allocation6], 128, 128, 8
    $region13: #{tpu_custom_call.1} parent=1 // pred_fallthru
      _
    // Predicated region
    $region14: #{tpu_custom_call.1} parent=1 // pred_check
      _
    $region15: #{tpu_custom_call.1} parent=1 // pred_check_branch
      %156 = sbr.rel (0) target = $region17
    $region16: #{tpu_custom_call.1} parent=1 // pred_region
      %157 = dma.done [#allocation6], 256
    $region17: #{tpu_custom_call.1} parent=1 // pred_fallthru
      _
    %158 = vsyncpa [#allocation5], 1
    %159 = vsyncpa [#allocation6], 1

</llo_original>
